<compile_context>
chip_gen: v7x
topology: tpu7x:2x2x1
jax: 0.10.0
libtpu: 0.0.40
codegen_flags: <defaults>
</compile_context>

<pallas_src>
import functools

import jax
import jax.numpy as jnp
from jax.experimental import pallas as pl
from jax.experimental.pallas import tpu as pltpu


def _round_up(x, m):
    return ((x + m - 1) // m) * m


def _pick_tb(batch, max_tb=8192):
    """Lane-axis batch tile: multiple of 128, >=2 grid steps for large B."""
    b128 = _round_up(max(batch, 1), 128)
    if b128 <= 128:
        return 128
    # Aim for at least two grid iterations so the "parallel" batch axis can
    # shard across both TensorCores on v7x; cap tiles at max_tb lanes so the
    # pipeline still has several steps for very large batches.
    return min(max_tb, _round_up(-(-b128 // 2), 128))


def _actor_kernel(x_t_ref, w1_ref, b1_ref, w2_ref, b2_ref, out_t_ref, *, mxu_dtype):
    # x_t_ref : [s_dim, TB]   (lane-dense batch tile)
    # w1_ref  : [n_l1, s_dim] (PyTorch [out, in], VMEM-resident)
    # b1_ref  : [n_l1, 1]
    # w2_ref  : [a_dim, n_l1]
    # b2_ref  : [a_dim, 1]
    # out_t_ref: [a_dim, TB]
    x_t = x_t_ref[...].astype(mxu_dtype)
    w1 = w1_ref[...].astype(mxu_dtype)
    # layer 1: h^T = W1 @ x^T  (MXU, f32 accumulate), bias + ReLU on the VPU.
    h = jnp.dot(w1, x_t, preferred_element_type=jnp.float32)        # [n_l1, TB]
    h = jnp.maximum(h + b1_ref[...], 0.0)
    # layer 2: y^T = W2 @ h^T  (MXU), bias on VPU, tanh on EUP.
    w2 = w2_ref[...].astype(mxu_dtype)
    y = jnp.dot(w2, h.astype(mxu_dtype), preferred_element_type=jnp.float32)
    out_t_ref[...] = jnp.tanh(y + b2_ref[...]).astype(out_t_ref.dtype)


def actor_forward_t(x_t, w1, b1, w2, b2, *, tb=None, mxu_dtype=jnp.bfloat16):
    """Feature-major Actor forward: x^T [s_dim, B] -> out^T [a_dim, B]."""
    s_dim, batch = x_t.shape
    n_l1 = w1.shape[0]
    a_dim = w2.shape[0]

    # Biases as column vectors so they broadcast along the lane (batch) axis.
    b1c = b1.reshape(n_l1, 1).astype(jnp.float32)
    b2c = b2.reshape(a_dim, 1).astype(jnp.float32)

    if tb is None:
        tb = _pick_tb(batch)
    grid = (pl.cdiv(batch, tb),)

    kernel = functools.partial(_actor_kernel, mxu_dtype=mxu_dtype)
    out_t = pl.pallas_call(
        kernel,
        out_shape=jax.ShapeDtypeStruct((a_dim, batch), jnp.float32),
        grid_spec=pltpu.PrefetchScalarGridSpec(
            num_scalar_prefetch=0,
            grid=grid,
            in_specs=[
                pl.BlockSpec((s_dim, tb), lambda i: (0, i)),      # x^T tile (lane-dense)
                pl.BlockSpec((n_l1, s_dim), lambda i: (0, 0)),    # W1 (resident)
                pl.BlockSpec((n_l1, 1), lambda i: (0, 0)),        # b1 (resident)
                pl.BlockSpec((a_dim, n_l1), lambda i: (0, 0)),    # W2 (resident)
                pl.BlockSpec((a_dim, 1), lambda i: (0, 0)),       # b2 (resident)
            ],
            out_specs=pl.BlockSpec((a_dim, tb), lambda i: (0, i)),  # out^T (lane-dense)
        ),
        compiler_params=pltpu.CompilerParams(
            dimension_semantics=("parallel",),   # shard batch tiles across v7x's 2 TCs
        ),
    )(x_t, w1, b1c, w2, b2c)
    return out_t


def actor_forward(x, w1, b1, w2, b2, *, tb=None, mxu_dtype=jnp.bfloat16):
    """Module-compatible entry point: x [B, s_dim] -> out [B, a_dim].

    The two transposes here are wrapper-side XLA relayouts of narrow arrays;
    prefer `actor_forward_t` when the caller can use feature-major activations.
    """
    out_t = actor_forward_t(x.T, w1, b1, w2, b2, tb=tb, mxu_dtype=mxu_dtype)
    return out_t.T


def init_params(key, s_dim, a_dim, n_l1=30):
    """Parameter init mirroring the PyTorch Actor (weights in [out, in] layout).

    l1: default nn.Linear init -> uniform(-1/sqrt(s_dim), 1/sqrt(s_dim)).
    l2: weight ~ Normal(0, 0.1) (explicit in the module), bias default uniform.
    """
    k1, k2, k3, k4 = jax.random.split(key, 4)
    bound1 = 1.0 / (s_dim ** 0.5)
    w1 = jax.random.uniform(k1, (n_l1, s_dim), jnp.float32, -bound1, bound1)
    b1 = jax.random.uniform(k2, (n_l1,), jnp.float32, -bound1, bound1)

    bound2 = 1.0 / (n_l1 ** 0.5)
    w2 = 0.1 * jax.random.normal(k3, (a_dim, n_l1), jnp.float32)
    b2 = jax.random.uniform(k4, (a_dim,), jnp.float32, -bound2, bound2)
    return w1, b1, w2, b2


if __name__ == "__main__":
    key = jax.random.PRNGKey(0)
    kx, kp = jax.random.split(key, 2)

    S_DIM, A_DIM, N_L1 = 16, 8, 30
    w1, b1, w2, b2 = init_params(kp, S_DIM, A_DIM, N_L1)

    # Small batches covering: block larger than batch (8), ragged tail (200),
    # and a multi-tile grid (384).
    for B in (8, 200, 384):
        kx, sub = jax.random.split(kx)
        x = jax.random.normal(sub, (B, S_DIM), jnp.float32)

        ref = jnp.tanh(jnp.maximum(x @ w1.T + b1, 0.0) @ w2.T + b2)

        # Default path (bf16 MXU operands, f32 accumulate / pointwise).
        out = jax.block_until_ready(actor_forward(x, w1, b1, w2, b2))
        assert out.shape == (B, A_DIM)
        assert jnp.allclose(out, ref, atol=1e-2, rtol=1e-2)

        # Bit-exact-path check (f32 MXU operands) against the f32 reference.
        out_f32 = jax.block_until_ready(
            actor_forward(x, w1, b1, w2, b2, mxu_dtype=jnp.float32))
        assert out_f32.shape == (B, A_DIM)
        assert jnp.allclose(out_f32, ref, atol=2e-5, rtol=2e-5)

    print("KERNEL_OK")
</pallas_src>

<mosaic_0001>
module attributes {stable_mosaic.version = 11 : i64} {
  func.func @_actor_kernel(%arg0: i32, %arg1: memref<16x128xf32, #tpu.memory_space<vmem>>, %arg2: memref<30x16xf32, #tpu.memory_space<vmem>>, %arg3: memref<30x1xf32, #tpu.memory_space<vmem>>, %arg4: memref<8x30xf32, #tpu.memory_space<vmem>>, %arg5: memref<8x1xf32, #tpu.memory_space<vmem>>, %arg6: memref<8x128xf32, #tpu.memory_space<vmem>>) attributes {dimension_semantics = [#tpu.dimension_semantics<parallel>], iteration_bounds = array<i64: 1>, scalar_prefetch = 0 : i64, scratch_operands = 0 : i64, tpu.core_type = #tpu.core_type<tc>, window_params = [{transform_indices = @transform_0, window_bounds = array<i64: 16, 128>}, {pipeline_mode = #tpu.pipeline_mode<synchronous>, transform_indices = @transform_1, window_bounds = array<i64: 30, 16>}, {pipeline_mode = #tpu.pipeline_mode<synchronous>, transform_indices = @transform_2, window_bounds = array<i64: 30, 1>}, {pipeline_mode = #tpu.pipeline_mode<synchronous>, transform_indices = @transform_3, window_bounds = array<i64: 8, 30>}, {pipeline_mode = #tpu.pipeline_mode<synchronous>, transform_indices = @transform_4, window_bounds = array<i64: 8, 1>}, {transform_indices = @transform_5, window_bounds = array<i64: 8, 128>}]} {
    %c0 = arith.constant 0 : index
    %c0_0 = arith.constant 0 : index
    %0 = vector.load %arg1[%c0, %c0_0] : memref<16x128xf32, #tpu.memory_space<vmem>>, vector<16x128xf32>
    %1 = arith.truncf %0 : vector<16x128xf32> to vector<16x128xbf16>
    %c0_1 = arith.constant 0 : index
    %c0_2 = arith.constant 0 : index
    %2 = vector.load %arg2[%c0_1, %c0_2] : memref<30x16xf32, #tpu.memory_space<vmem>>, vector<30x16xf32>
    %3 = arith.truncf %2 : vector<30x16xf32> to vector<30x16xbf16>
    %cst = arith.constant dense<0.000000e+00> : vector<30x128xf32>
    %4 = tpu.matmul %3, %1, %cst {dimension_numbers = #tpu.dot_dimension_numbers<[1], [0], [0], [1], [0, 0, 1, 1], [], []>} : vector<30x16xbf16>, vector<16x128xbf16>, vector<30x128xf32> -> vector<30x128xf32>
    %c0_3 = arith.constant 0 : index
    %c0_4 = arith.constant 0 : index
    %5 = vector.load %arg3[%c0_3, %c0_4] : memref<30x1xf32, #tpu.memory_space<vmem>>, vector<30x1xf32>
    %6 = vector.broadcast %5 : vector<30x1xf32> to vector<30x128xf32>
    %7 = arith.addf %4, %6 : vector<30x128xf32>
    %cst_5 = arith.constant 0.000000e+00 : f32
    %8 = vector.broadcast %cst_5 : f32 to vector<30x128xf32>
    %9 = arith.maximumf %7, %8 : vector<30x128xf32>
    %c0_6 = arith.constant 0 : index
    %c0_7 = arith.constant 0 : index
    %10 = vector.load %arg4[%c0_6, %c0_7] : memref<8x30xf32, #tpu.memory_space<vmem>>, vector<8x30xf32>
    %11 = arith.truncf %10 : vector<8x30xf32> to vector<8x30xbf16>
    %12 = arith.truncf %9 : vector<30x128xf32> to vector<30x128xbf16>
    %cst_8 = arith.constant dense<0.000000e+00> : vector<8x128xf32>
    %13 = tpu.matmul %11, %12, %cst_8 {dimension_numbers = #tpu.dot_dimension_numbers<[1], [0], [0], [1], [0, 0, 1, 1], [], []>} : vector<8x30xbf16>, vector<30x128xbf16>, vector<8x128xf32> -> vector<8x128xf32>
    %c0_9 = arith.constant 0 : index
    %c0_10 = arith.constant 0 : index
    %14 = vector.load %arg5[%c0_9, %c0_10] : memref<8x1xf32, #tpu.memory_space<vmem>>, vector<8x1xf32>
    %15 = vector.broadcast %14 : vector<8x1xf32> to vector<8x128xf32>
    %16 = arith.addf %13, %15 : vector<8x128xf32>
    %17 = math.tanh %16 : vector<8x128xf32>
    %c0_11 = arith.constant 0 : index
    %c0_12 = arith.constant 0 : index
    %18 = vector.load %arg6[%c0_11, %c0_12] : memref<8x128xf32, #tpu.memory_space<vmem>>, vector<8x128xf32>
    tpu.vector_store %arg6[%c0_11, %c0_12], %17 {strides = array<i32>} : memref<8x128xf32, #tpu.memory_space<vmem>>, vector<8x128xf32>,
    return
  }
  func.func @transform_0(%arg0: i32) -> (i32, i32) {
    %c0_i32 = arith.constant 0 : i32
    %c0_i32_0 = arith.constant 0 : i32
    return %c0_i32, %arg0 : i32, i32
  }
  func.func @transform_1(%arg0: i32) -> (i32, i32) {
    %c0_i32 = arith.constant 0 : i32
    %c0_i32_0 = arith.constant 0 : i32
    %c0_i32_1 = arith.constant 0 : i32
    return %c0_i32, %c0_i32_0 : i32, i32
  }
  func.func @transform_2(%arg0: i32) -> (i32, i32) {
    %c0_i32 = arith.constant 0 : i32
    %c0_i32_0 = arith.constant 0 : i32
    %c0_i32_1 = arith.constant 0 : i32
    return %c0_i32, %c0_i32_0 : i32, i32
  }
  func.func @transform_3(%arg0: i32) -> (i32, i32) {
    %c0_i32 = arith.constant 0 : i32
    %c0_i32_0 = arith.constant 0 : i32
    %c0_i32_1 = arith.constant 0 : i32
    return %c0_i32, %c0_i32_0 : i32, i32
  }
  func.func @transform_4(%arg0: i32) -> (i32, i32) {
    %c0_i32 = arith.constant 0 : i32
    %c0_i32_0 = arith.constant 0 : i32
    %c0_i32_1 = arith.constant 0 : i32
    return %c0_i32, %c0_i32_0 : i32, i32
  }
  func.func @transform_5(%arg0: i32) -> (i32, i32) {
    %c0_i32 = arith.constant 0 : i32
    %c0_i32_0 = arith.constant 0 : i32
    return %c0_i32, %arg0 : i32, i32
  }
}

</mosaic_0001>

<llo_original>
// kernel: tpu_custom_call.1
$region0: #{tpu_custom_call.1}
  #allocation0 [shape = 'u32[]', space=smem, size = 0x4, offset = 0x4, fixed_abs, tag = 'smem constant byte address 0x4 - core index']
  #allocation1 [shape = 'u32[144,128]{1,0:T(1,128)}', space=vmem, size = 0x12000, scoped, tag = 'internal scratch']
  %s0 = inlined_call_operand.vmem [shape: f32[16,8], index: 0, kind: input, shape index: {}]
  %s1 = inlined_call_operand.vmem [shape: f32[30,16], index: 1, kind: input, shape index: {}]
  %s2 = inlined_call_operand.vmem [shape: f32[30,1], index: 2, kind: input, shape index: {}]
  %s3 = inlined_call_operand.vmem [shape: f32[8,30], index: 3, kind: input, shape index: {}]
  %s4 = inlined_call_operand.vmem [shape: f32[8,1], index: 4, kind: input, shape index: {}]
  %s5 = inlined_call_operand.hbm [shape: f32[8,8], index: 5, kind: output, shape index: {}]
  %s6 = sld [smem:[#allocation0]]
  $region30: #{tpu_custom_call.1} parent=0
    _
  %s8 = ssub.s32 1, %s6
  %s9 = scalar_select 0, %s8, %s6
  $region1: #{tpu_custom_call.1} parent=0
    #allocation2 [shape = 'u8[4096]{0}', space=vmem, size = 0x1000, scoped, tag = 'output window, operand 0, single buffered']
    #allocation3 [shape = 's32[1]{0}', space=sflag, size = 0x4, scoped, tag = 'scoped memory for tpu_custom_call.1']
    %10 = vsyncpa [#allocation3], 0
    // Predicated region
    $region2: #{tpu_custom_call.1} parent=1 // pred_check
      _
    $region3: #{tpu_custom_call.1} parent=1 // pred_check_branch
      %12 = sbr.rel (0) target = $region5
    $region4: #{tpu_custom_call.1} parent=1 // pred_region
      _
    $region5: #{tpu_custom_call.1} parent=1 // pred_fallthru
      _
    // Predicated region
    $region6: #{tpu_custom_call.1} parent=1 // pred_check
      _
    $region7: #{tpu_custom_call.1} parent=1 // pred_check_branch
      %14 = sbr.rel (0) target = $region9
    $region8: #{tpu_custom_call.1} parent=1 // pred_region
      _
    $region9: #{tpu_custom_call.1} parent=1 // pred_fallthru
      _
    // Predicated region
    $region10: #{tpu_custom_call.1} parent=1 // pred_check
      _
    $region11: #{tpu_custom_call.1} parent=1 // pred_check_branch
      %16 = sbr.rel (0) target = $region13
    $region12: #{tpu_custom_call.1} parent=1 // pred_region
      _
    $region13: #{tpu_custom_call.1} parent=1 // pred_fallthru
      _
    // Predicated region
    $region14: #{tpu_custom_call.1} parent=1 // pred_check
      _
    $region15: #{tpu_custom_call.1} parent=1 // pred_check_branch
      %18 = sbr.rel (0) target = $region17
    $region16: #{tpu_custom_call.1} parent=1 // pred_region
      _
    $region17: #{tpu_custom_call.1} parent=1 // pred_fallthru
      _
    // Predicated region
    $region18: #{tpu_custom_call.1} parent=1 // pred_check
      _
    $region19: #{tpu_custom_call.1} parent=1 // pred_check_branch
      %20 = sbr.rel (0) target = $region21
    $region20: #{tpu_custom_call.1} parent=1 // pred_region
      _
    $region21: #{tpu_custom_call.1} parent=1 // pred_fallthru
      _
    %v22 = vld [vmem:[%s0] sm:$0xff]
    %v23 = vld [vmem:[%s0 + $0x8] sm:$0xff]
    %v24 = vpack.c.bf16 %v23, %v22
    %v25 = vld [vmem:[%s1] sm:$0xff]
    %v26 = vld [vmem:[%s1 + $0x8] sm:$0xff]
    %v27 = vld [vmem:[%s1 + $0x10] sm:$0xff]
    %v28 = vld [vmem:[%s1 + $0x18] sm:$0x3f]
    %v29 = vpack.c.bf16 %v26, %v25
    %v30 = vpack.c.bf16 %v28, %v27
    %v31 = vld [vmem:[%s2] sm:$0xff]
    %v32 = vld [vmem:[%s2 + $0x8] sm:$0xff]
    %v33 = vld [vmem:[%s2 + $0x10] sm:$0xff]
    %v34 = vld [vmem:[%s2 + $0x18] sm:$0x3f]
    %36 = vset.pattern.permute.xlu0 0
    %37 = vperm.xlu0 %36, %v31
    %v38 = vpop.permute.xlu0 %37
    %41 = vset.pattern.permute.xlu0 0
    %42 = vperm.xlu0 %41, %v32
    %v43 = vpop.permute.xlu0 %42
    %46 = vset.pattern.permute.xlu0 0
    %47 = vperm.xlu0 %46, %v33
    %v48 = vpop.permute.xlu0 %47
    %51 = vset.pattern.permute.xlu0 0
    %52 = vperm.xlu0 %51, %v34
    %v53 = vpop.permute.xlu0 %52
    %vm55 = vcmask 130048
    %v57 = vsel %vm55, %v29, 0
    %v60 = vsel %vm55, %v30, 0
    %62 = vmatprep.subr.bf16.mxu0 0
    %63 = vmatpush1.bf16.msra.mxu0 %v24
    %64 = vmatprep.subr.bf16.mxu0 0
    %65 = vmatpush1.bf16.msra.mxu0 0
    %66 = vmatprep.subr.bf16.mxu0 0
    %67 = vmatpush1.bf16.msra.mxu0 0
    %68 = vmatprep.subr.bf16.mxu0 0
    %69 = vmatpush1.bf16.msra.mxu0 0
    %70 = vmatprep.subr.bf16.mxu0 0
    %71 = vmatpush1.bf16.msra.mxu0 0
    %72 = vmatprep.subr.bf16.mxu0 0
    %73 = vmatpush1.bf16.msra.mxu0 0
    %74 = vmatprep.subr.bf16.mxu0 0
    %75 = vmatpush1.bf16.msra.mxu0 0
    %76 = vmatprep.subr.bf16.mxu0 0
    %77 = vmatpush1.bf16.msra.mxu0 0
    %78 = vmatprep.subr.bf16.mxu0 0
    %79 = vmatpush1.bf16.msra.mxu0 0
    %80 = vmatprep.subr.bf16.mxu0 0
    %81 = vmatpush1.bf16.msra.mxu0 0
    %82 = vmatprep.subr.bf16.mxu0 0
    %83 = vmatpush1.bf16.msra.mxu0 0
    %84 = vmatprep.subr.bf16.mxu0 0
    %85 = vmatpush1.bf16.msra.mxu0 0
    %86 = vmatprep.subr.bf16.mxu0 0
    %87 = vmatpush1.bf16.msra.mxu0 0
    %88 = vmatprep.subr.bf16.mxu0 0
    %89 = vmatpush1.bf16.msra.mxu0 0
    %90 = vmatprep.subr.bf16.mxu0 0
    %91 = vmatpush1.bf16.msra.mxu0 0
    %92 = vmatprep.subr.bf16.mxu0 0
    %93 = vmatpush1.bf16.msra.mxu0 0
    %94 = vmatprep.mubr.bf16.mxu0 0
    %95 = vmatmul.mubr.bf16.gmra.mrb[0].mxu0 %v57
    %v96 = vpop.f32.mrb[0].mxu0
    %v97 = vadd.f32 %v38, %v96
    %v98 = vpop.f32.mrb[0].mxu0
    %v99 = vpop.f32.mrb[0].mxu0
    %v100 = vadd.f32 %v43, %v99
    %v101 = vpop.f32.mrb[0].mxu0
    %102 = vmatprep.mubr.bf16.mxu0 0
    %103 = vmatmul.mubr.bf16.gmra.mrb[0].mxu0 %v60
    %v104 = vpop.f32.mrb[0].mxu0
    %v105 = vadd.f32 %v48, %v104
    %v106 = vpop.f32.mrb[0].mxu0
    %v107 = vpop.f32.mrb[0].mxu0
    %v108 = vadd.f32 %v53, %v107
    %v109 = vpop.f32.mrb[0].mxu0
    %110 = vdwg.mxu0
    %v111 = vmax.f32 %v97, 0.0
    %v112 = vmax.f32 %v100, 0.0
    %v113 = vmax.f32 %v105, 0.0
    %v114 = vmax.f32 %v108, 0.0
    %v115 = vld [vmem:[%s3] sm:$0xff]
    %v116 = vpack.c.bf16 %v115, %v115
    %v117 = vpack.c.bf16 %v112, %v111
    %v118 = vpack.c.bf16 %v114, %v113
    %v119 = vld [vmem:[%s4] sm:$0xff]
    %121 = vset.pattern.permute.xlu0 0
    %122 = vperm.xlu0 %121, %v119
    %v123 = vpop.permute.xlu0 %122
    %vm125 = vcmask 244736
    %v127 = vsel %vm125, %v116, 0
    %vm129 = vcmask 1046528
    %v131 = vsel %vm129, %v118, 0
    %133 = vmatprep.subr.bf16.mxu0 0
    %134 = vmatpush1.bf16.msra.mxu0 %v117
    %135 = vmatprep.subr.bf16.mxu0 0
    %136 = vmatpush1.bf16.msra.mxu0 %v131
    %137 = vmatprep.subr.bf16.mxu0 0
    %138 = vmatpush1.bf16.msra.mxu0 0
    %139 = vmatprep.subr.bf16.mxu0 0
    %140 = vmatpush1.bf16.msra.mxu0 0
    %141 = vmatprep.subr.bf16.mxu0 0
    %142 = vmatpush1.bf16.msra.mxu0 0
    %143 = vmatprep.subr.bf16.mxu0 0
    %144 = vmatpush1.bf16.msra.mxu0 0
    %145 = vmatprep.subr.bf16.mxu0 0
    %146 = vmatpush1.bf16.msra.mxu0 0
    %147 = vmatprep.subr.bf16.mxu0 0
    %148 = vmatpush1.bf16.msra.mxu0 0
    %149 = vmatprep.subr.bf16.mxu0 0
    %150 = vmatpush1.bf16.msra.mxu0 0
    %151 = vmatprep.subr.bf16.mxu0 0
    %152 = vmatpush1.bf16.msra.mxu0 0
    %153 = vmatprep.subr.bf16.mxu0 0
    %154 = vmatpush1.bf16.msra.mxu0 0
    %155 = vmatprep.subr.bf16.mxu0 0
    %156 = vmatpush1.bf16.msra.mxu0 0
    %157 = vmatprep.subr.bf16.mxu0 0
    %158 = vmatpush1.bf16.msra.mxu0 0
    %159 = vmatprep.subr.bf16.mxu0 0
    %160 = vmatpush1.bf16.msra.mxu0 0
    %161 = vmatprep.subr.bf16.mxu0 0
    %162 = vmatpush1.bf16.msra.mxu0 0
    %163 = vmatprep.subr.bf16.mxu0 0
    %164 = vmatpush1.bf16.msra.mxu0 0
    %165 = vmatprep.mubr.bf16.mxu0 0
    %166 = vmatmul.mubr.bf16.gmra.mrb[0].mxu0 %v127
    %v167 = vpop.f32.mrb[0].mxu0
    %v168 = vadd.f32 %v123, %v167
    %v169 = vpop.f32.mrb[0].mxu0
    %v170 = vpop.f32.mrb[0].mxu0
    %v171 = vpop.f32.mrb[0].mxu0
    %172 = vdwg.mxu0
    %v173 = vtanh.pop %v168
    %174 = vst [vmem:[#allocation2] sm:$0xff] %v173
    // Predicated region
    $region22: #{tpu_custom_call.1} parent=1 // pred_check
      _
    $region23: #{tpu_custom_call.1} parent=1 // pred_check_branch
      %176 = sbr.rel (0) target = $region25
    $region24: #{tpu_custom_call.1} parent=1 // pred_region
      %s178 = ssub.s32 128, 128
      %179 = vsyncadd [#allocation3], %s178
      %s181 = sshll.u32 [#allocation2], 4
      %s182 = int_to_ptr.vmem [resolvable:$true] %s181
      %184 = dma.vmem_to_hbm [thread:$0]  %s182, 128, %s5, [#allocation3]
    $region25: #{tpu_custom_call.1} parent=1 // pred_fallthru
      _
    // Predicated region
    $region26: #{tpu_custom_call.1} parent=1 // pred_check
      _
    $region27: #{tpu_custom_call.1} parent=1 // pred_check_branch
      %186 = sbr.rel (0) target = $region29
    $region28: #{tpu_custom_call.1} parent=1 // pred_region
      %187 = dma.done [#allocation3], 128
    $region29: #{tpu_custom_call.1} parent=1 // pred_fallthru
      _
    %188 = vsyncpa [#allocation3], 1

</llo_original>
